<compile_context>
chip_gen: v6e
topology: v6e:2x2x1
jax: 0.10.0
libtpu: 0.0.40
codegen_flags: <defaults>
</compile_context>

<pallas_src>
import functools

import jax
import jax.numpy as jnp
from jax.experimental import pallas as pl
from jax.experimental.pallas import tpu as pltpu

BN_EPS = 1e-5
LANE = 128


def _round_up(n, m):
    return (n + m - 1) // m * m


def _pad2d(a, rows, cols):
    return jnp.pad(a, ((0, rows - a.shape[0]), (0, cols - a.shape[1])))


def basic_nn_kernel(x_ref, w1_ref, b1_ref, w2_ref, b2_ref, w3_ref, b3_ref, o_ref):
    # fc1 (+folded bn1) + relu1   (drop1 == identity in eval)
    h = jnp.dot(x_ref[...], w1_ref[...], preferred_element_type=jnp.float32)
    h = jnp.maximum(h + b1_ref[...], 0.0)
    # fc2 (+folded bn2) + relu2   (drop2 == identity in eval)
    h = jnp.dot(h, w2_ref[...], preferred_element_type=jnp.float32)
    h = jnp.maximum(h + b2_ref[...], 0.0)
    # fc3
    o_ref[...] = (
        jnp.dot(h, w3_ref[...], preferred_element_type=jnp.float32) + b3_ref[...]
    ).astype(o_ref.dtype)


@functools.partial(jax.jit, static_argnames=())
def basic_nn_forward(x, params):
    """x: [B, input_dim] f32.  params: dict of f32 arrays (see init_params)."""
    B, input_dim = x.shape
    hidden1 = params["w1"].shape[1]
    hidden2 = params["w2"].shape[1]
    num_classes = params["w3"].shape[1]

    # ---- Fold eval-mode BatchNorm + bias into the linear weights (wrapper-side). ----
    s1 = params["g1"] * jax.lax.rsqrt(params["v1"] + BN_EPS)        # (1, H1)
    w1f = params["w1"] * s1                                          # scale columns
    b1f = (params["b1"] - params["m1"]) * s1 + params["be1"]

    s2 = params["g2"] * jax.lax.rsqrt(params["v2"] + BN_EPS)        # (1, H2)
    w2f = params["w2"] * s2
    b2f = (params["b2"] - params["m2"]) * s2 + params["be2"]

    w3f, b3f = params["w3"], params["b3"]

    # ---- Pad every feature dim to a multiple of 128 lanes (zero padding is exact:
    #      padded lanes stay 0 through relu and hit zero weight rows downstream). ----
    Din = _round_up(input_dim, LANE)
    H1 = _round_up(hidden1, LANE)
    H2 = _round_up(hidden2, LANE)
    NC = _round_up(num_classes, LANE)

    # ---- Batch tiling: large resident tiles, padded batch, weights stay resident. ----
    TILE_B = max(8, min(512, _round_up(B, 8)))
    Bp = _round_up(B, TILE_B)
    n_tiles = Bp // TILE_B

    x_p = _pad2d(x.astype(jnp.float32), Bp, Din)
    w1_p, b1_p = _pad2d(w1f, Din, H1), _pad2d(b1f, 1, H1)
    w2_p, b2_p = _pad2d(w2f, H1, H2), _pad2d(b2f, 1, H2)
    w3_p, b3_p = _pad2d(w3f, H2, NC), _pad2d(b3f, 1, NC)

    const2d = lambda i: (0, 0)  # weights/biases: same block every grid step (resident)

    out_p = pl.pallas_call(
        basic_nn_kernel,
        out_shape=jax.ShapeDtypeStruct((Bp, NC), jnp.float32),
        grid=(n_tiles,),
        in_specs=[
            pl.BlockSpec((TILE_B, Din), lambda i: (i, 0)),
            pl.BlockSpec((Din, H1), const2d),
            pl.BlockSpec((1, H1), const2d),
            pl.BlockSpec((H1, H2), const2d),
            pl.BlockSpec((1, H2), const2d),
            pl.BlockSpec((H2, NC), const2d),
            pl.BlockSpec((1, NC), const2d),
        ],
        out_specs=pl.BlockSpec((TILE_B, NC), lambda i: (i, 0)),
        compiler_params=pltpu.CompilerParams(
            dimension_semantics=("parallel",),
        ),
    )(x_p, w1_p, b1_p, w2_p, b2_p, w3_p, b3_p)

    return out_p[:B, :num_classes]


def init_params(key, input_dim, hidden_dim1, hidden_dim2, num_classes):
    """Deterministic synthetic parameters (shapes match the PyTorch module)."""
    ks = jax.random.split(key, 10)

    def linear(kw, kb, fan_in, fan_out):
        bound = 1.0 / jnp.sqrt(fan_in)
        w = jax.random.uniform(kw, (fan_in, fan_out), jnp.float32, -bound, bound)
        b = jax.random.uniform(kb, (1, fan_out), jnp.float32, -bound, bound)
        return w, b

    w1, b1 = linear(ks[0], ks[1], input_dim, hidden_dim1)
    w2, b2 = linear(ks[2], ks[3], hidden_dim1, hidden_dim2)
    w3, b3 = linear(ks[4], ks[5], hidden_dim2, num_classes)

    def bn(kg, kb, dim):
        g = 1.0 + 0.1 * jax.random.normal(kg, (1, dim), jnp.float32)
        be = 0.1 * jax.random.normal(kb, (1, dim), jnp.float32)
        m = jnp.zeros((1, dim), jnp.float32)   # running_mean init
        v = jnp.ones((1, dim), jnp.float32)    # running_var init
        return g, be, m, v

    g1, be1, m1, v1 = bn(ks[6], ks[7], hidden_dim1)
    g2, be2, m2, v2 = bn(ks[8], ks[9], hidden_dim2)   # distinct keys (fixed key reuse)

    return dict(
        w1=w1, b1=b1, g1=g1, be1=be1, m1=m1, v1=v1,
        w2=w2, b2=b2, g2=g2, be2=be2, m2=m2, v2=v2,
        w3=w3, b3=b3,
    )


def reference_forward(x, p):
    """Pure-JAX reference of the eval-mode PyTorch forward."""
    h = x @ p["w1"] + p["b1"]
    h = (h - p["m1"]) / jnp.sqrt(p["v1"] + BN_EPS) * p["g1"] + p["be1"]
    h = jnp.maximum(h, 0.0)
    h = h @ p["w2"] + p["b2"]
    h = (h - p["m2"]) / jnp.sqrt(p["v2"] + BN_EPS) * p["g2"] + p["be2"]
    h = jnp.maximum(h, 0.0)
    return h @ p["w3"] + p["b3"]


if __name__ == "__main__":
    input_dim, hidden_dim1, hidden_dim2, num_classes = 32, 64, 32, 8
    batch = 8

    key = jax.random.PRNGKey(0)
    k_x, k_p = jax.random.split(key)
    x = jax.random.normal(k_x, (batch, input_dim), jnp.float32)
    params = init_params(k_p, input_dim, hidden_dim1, hidden_dim2, num_classes)

    out = basic_nn_forward(x, params)
    out = jax.block_until_ready(out)

    ref = reference_forward(x, params)
    assert out.shape == (batch, num_classes)
    assert jnp.allclose(out, ref, atol=1e-4, rtol=1e-4), "mismatch vs reference"

    print("KERNEL_OK")
</pallas_src>

<mosaic_0001>
module attributes {stable_mosaic.version = 11 : i64} {
  func.func @basic_nn_kernel(%arg0: i32, %arg1: memref<8x128xf32, #tpu.memory_space<vmem>>, %arg2: memref<128x128xf32, #tpu.memory_space<vmem>>, %arg3: memref<1x128xf32, #tpu.memory_space<vmem>>, %arg4: memref<128x128xf32, #tpu.memory_space<vmem>>, %arg5: memref<1x128xf32, #tpu.memory_space<vmem>>, %arg6: memref<128x128xf32, #tpu.memory_space<vmem>>, %arg7: memref<1x128xf32, #tpu.memory_space<vmem>>, %arg8: memref<8x128xf32, #tpu.memory_space<vmem>>) attributes {dimension_semantics = [#tpu.dimension_semantics<parallel>], iteration_bounds = array<i64: 1>, scalar_prefetch = 0 : i64, scratch_operands = 0 : i64, tpu.core_type = #tpu.core_type<tc>, window_params = [{transform_indices = @transform_0, window_bounds = array<i64: 8, 128>}, {pipeline_mode = #tpu.pipeline_mode<synchronous>, transform_indices = @transform_1, window_bounds = array<i64: 128, 128>}, {pipeline_mode = #tpu.pipeline_mode<synchronous>, transform_indices = @transform_2, window_bounds = array<i64: 1, 128>}, {pipeline_mode = #tpu.pipeline_mode<synchronous>, transform_indices = @transform_3, window_bounds = array<i64: 128, 128>}, {pipeline_mode = #tpu.pipeline_mode<synchronous>, transform_indices = @transform_4, window_bounds = array<i64: 1, 128>}, {pipeline_mode = #tpu.pipeline_mode<synchronous>, transform_indices = @transform_5, window_bounds = array<i64: 128, 128>}, {pipeline_mode = #tpu.pipeline_mode<synchronous>, transform_indices = @transform_6, window_bounds = array<i64: 1, 128>}, {transform_indices = @transform_7, window_bounds = array<i64: 8, 128>}]} {
    %c0 = arith.constant 0 : index
    %c0_0 = arith.constant 0 : index
    %0 = vector.load %arg1[%c0, %c0_0] : memref<8x128xf32, #tpu.memory_space<vmem>>, vector<8x128xf32>
    %c0_1 = arith.constant 0 : index
    %c0_2 = arith.constant 0 : index
    %1 = vector.load %arg2[%c0_1, %c0_2] : memref<128x128xf32, #tpu.memory_space<vmem>>, vector<128x128xf32>
    %cst = arith.constant dense<0.000000e+00> : vector<8x128xf32>
    %2 = tpu.matmul %0, %1, %cst {dimension_numbers = #tpu.dot_dimension_numbers<[1], [0], [0], [1], [0, 0, 1, 1], [], []>} : vector<8x128xf32>, vector<128x128xf32>, vector<8x128xf32> -> vector<8x128xf32>
    %c0_3 = arith.constant 0 : index
    %c0_4 = arith.constant 0 : index
    %3 = vector.load %arg3[%c0_3, %c0_4] : memref<1x128xf32, #tpu.memory_space<vmem>>, vector<1x128xf32>
    %4 = vector.broadcast %3 : vector<1x128xf32> to vector<8x128xf32>
    %5 = arith.addf %2, %4 : vector<8x128xf32>
    %cst_5 = arith.constant 0.000000e+00 : f32
    %6 = vector.broadcast %cst_5 : f32 to vector<8x128xf32>
    %7 = arith.maximumf %5, %6 : vector<8x128xf32>
    %c0_6 = arith.constant 0 : index
    %c0_7 = arith.constant 0 : index
    %8 = vector.load %arg4[%c0_6, %c0_7] : memref<128x128xf32, #tpu.memory_space<vmem>>, vector<128x128xf32>
    %cst_8 = arith.constant dense<0.000000e+00> : vector<8x128xf32>
    %9 = tpu.matmul %7, %8, %cst_8 {dimension_numbers = #tpu.dot_dimension_numbers<[1], [0], [0], [1], [0, 0, 1, 1], [], []>} : vector<8x128xf32>, vector<128x128xf32>, vector<8x128xf32> -> vector<8x128xf32>
    %c0_9 = arith.constant 0 : index
    %c0_10 = arith.constant 0 : index
    %10 = vector.load %arg5[%c0_9, %c0_10] : memref<1x128xf32, #tpu.memory_space<vmem>>, vector<1x128xf32>
    %11 = vector.broadcast %10 : vector<1x128xf32> to vector<8x128xf32>
    %12 = arith.addf %9, %11 : vector<8x128xf32>
    %cst_11 = arith.constant 0.000000e+00 : f32
    %13 = vector.broadcast %cst_11 : f32 to vector<8x128xf32>
    %14 = arith.maximumf %12, %13 : vector<8x128xf32>
    %c0_12 = arith.constant 0 : index
    %c0_13 = arith.constant 0 : index
    %15 = vector.load %arg6[%c0_12, %c0_13] : memref<128x128xf32, #tpu.memory_space<vmem>>, vector<128x128xf32>
    %cst_14 = arith.constant dense<0.000000e+00> : vector<8x128xf32>
    %16 = tpu.matmul %14, %15, %cst_14 {dimension_numbers = #tpu.dot_dimension_numbers<[1], [0], [0], [1], [0, 0, 1, 1], [], []>} : vector<8x128xf32>, vector<128x128xf32>, vector<8x128xf32> -> vector<8x128xf32>
    %c0_15 = arith.constant 0 : index
    %c0_16 = arith.constant 0 : index
    %17 = vector.load %arg7[%c0_15, %c0_16] : memref<1x128xf32, #tpu.memory_space<vmem>>, vector<1x128xf32>
    %18 = vector.broadcast %17 : vector<1x128xf32> to vector<8x128xf32>
    %19 = arith.addf %16, %18 : vector<8x128xf32>
    %c0_17 = arith.constant 0 : index
    %c0_18 = arith.constant 0 : index
    %20 = vector.load %arg8[%c0_17, %c0_18] : memref<8x128xf32, #tpu.memory_space<vmem>>, vector<8x128xf32>
    tpu.vector_store %arg8[%c0_17, %c0_18], %19 {strides = array<i32>} : memref<8x128xf32, #tpu.memory_space<vmem>>, vector<8x128xf32>,
    return
  }
  func.func @transform_0(%arg0: i32) -> (i32, i32) {
    %c0_i32 = arith.constant 0 : i32
    %c0_i32_0 = arith.constant 0 : i32
    return %arg0, %c0_i32 : i32, i32
  }
  func.func @transform_1(%arg0: i32) -> (i32, i32) {
    %c0_i32 = arith.constant 0 : i32
    %c0_i32_0 = arith.constant 0 : i32
    %c0_i32_1 = arith.constant 0 : i32
    return %c0_i32, %c0_i32_0 : i32, i32
  }
  func.func @transform_2(%arg0: i32) -> (i32, i32) {
    %c0_i32 = arith.constant 0 : i32
    %c0_i32_0 = arith.constant 0 : i32
    %c0_i32_1 = arith.constant 0 : i32
    return %c0_i32, %c0_i32_0 : i32, i32
  }
  func.func @transform_3(%arg0: i32) -> (i32, i32) {
    %c0_i32 = arith.constant 0 : i32
    %c0_i32_0 = arith.constant 0 : i32
    %c0_i32_1 = arith.constant 0 : i32
    return %c0_i32, %c0_i32_0 : i32, i32
  }
  func.func @transform_4(%arg0: i32) -> (i32, i32) {
    %c0_i32 = arith.constant 0 : i32
    %c0_i32_0 = arith.constant 0 : i32
    %c0_i32_1 = arith.constant 0 : i32
    return %c0_i32, %c0_i32_0 : i32, i32
  }
  func.func @transform_5(%arg0: i32) -> (i32, i32) {
    %c0_i32 = arith.constant 0 : i32
    %c0_i32_0 = arith.constant 0 : i32
    %c0_i32_1 = arith.constant 0 : i32
    return %c0_i32, %c0_i32_0 : i32, i32
  }
  func.func @transform_6(%arg0: i32) -> (i32, i32) {
    %c0_i32 = arith.constant 0 : i32
    %c0_i32_0 = arith.constant 0 : i32
    %c0_i32_1 = arith.constant 0 : i32
    return %c0_i32, %c0_i32_0 : i32, i32
  }
  func.func @transform_7(%arg0: i32) -> (i32, i32) {
    %c0_i32 = arith.constant 0 : i32
    %c0_i32_0 = arith.constant 0 : i32
    return %arg0, %c0_i32 : i32, i32
  }
}

</mosaic_0001>

<llo_original>
// kernel: basic_nn_forward.1
$region0: #{basic_nn_forward.1}
  #allocation0 [shape = 'u32[]', space=smem, size = 0x4, offset = 0x4, fixed_abs, tag = 'smem constant byte address 0x4 - core index']
  #allocation1 [shape = 'u32[144,128]{1,0:T(1,128)}', space=vmem, size = 0x12000, scoped, tag = 'internal scratch']
  %s0 = inlined_call_operand.vmem [shape: f32[8,128], index: 0, kind: input, shape index: {}]
  %s1 = inlined_call_operand.vmem [shape: f32[128,128], index: 1, kind: input, shape index: {}]
  %s2 = inlined_call_operand.vmem [shape: f32[1,128], index: 2, kind: input, shape index: {}]
  %s3 = inlined_call_operand.vmem [shape: f32[128,128], index: 3, kind: input, shape index: {}]
  %s4 = inlined_call_operand.vmem [shape: f32[1,128], index: 4, kind: input, shape index: {}]
  %s5 = inlined_call_operand.vmem [shape: f32[128,128], index: 5, kind: input, shape index: {}]
  %s6 = inlined_call_operand.vmem [shape: f32[1,128], index: 6, kind: input, shape index: {}]
  %s7 = inlined_call_operand.hbm [shape: f32[8,128], index: 7, kind: output, shape index: {}]
  %s8 = sld [smem:[#allocation0]]
  $region38: #{basic_nn_forward.1} parent=0
    _
  %s10 = ssub.s32 1, %s8
  %s11 = scalar_select 0, %s10, %s8
  $region1: #{basic_nn_forward.1} parent=0
    #allocation2 [shape = 'u8[4096]{0}', space=vmem, size = 0x1000, scoped, tag = 'output window, operand 0, single buffered']
    #allocation3 [shape = 's32[1]{0}', space=sflag, size = 0x4, scoped, tag = 'scoped memory for basic_nn_forward.1']
    %12 = vsyncpa [#allocation3], 0
    // Predicated region
    $region2: #{basic_nn_forward.1} parent=1 // pred_check
      _
    $region3: #{basic_nn_forward.1} parent=1 // pred_check_branch
      %14 = sbr.rel (0) target = $region5
    $region4: #{basic_nn_forward.1} parent=1 // pred_region
      _
    $region5: #{basic_nn_forward.1} parent=1 // pred_fallthru
      _
    // Predicated region
    $region6: #{basic_nn_forward.1} parent=1 // pred_check
      _
    $region7: #{basic_nn_forward.1} parent=1 // pred_check_branch
      %16 = sbr.rel (0) target = $region9
    $region8: #{basic_nn_forward.1} parent=1 // pred_region
      _
    $region9: #{basic_nn_forward.1} parent=1 // pred_fallthru
      _
    // Predicated region
    $region10: #{basic_nn_forward.1} parent=1 // pred_check
      _
    $region11: #{basic_nn_forward.1} parent=1 // pred_check_branch
      %18 = sbr.rel (0) target = $region13
    $region12: #{basic_nn_forward.1} parent=1 // pred_region
      _
    $region13: #{basic_nn_forward.1} parent=1 // pred_fallthru
      _
    // Predicated region
    $region14: #{basic_nn_forward.1} parent=1 // pred_check
      _
    $region15: #{basic_nn_forward.1} parent=1 // pred_check_branch
      %20 = sbr.rel (0) target = $region17
    $region16: #{basic_nn_forward.1} parent=1 // pred_region
      _
    $region17: #{basic_nn_forward.1} parent=1 // pred_fallthru
      _
    // Predicated region
    $region18: #{basic_nn_forward.1} parent=1 // pred_check
      _
    $region19: #{basic_nn_forward.1} parent=1 // pred_check_branch
      %22 = sbr.rel (0) target = $region21
    $region20: #{basic_nn_forward.1} parent=1 // pred_region
      _
    $region21: #{basic_nn_forward.1} parent=1 // pred_fallthru
      _
    // Predicated region
    $region22: #{basic_nn_forward.1} parent=1 // pred_check
      _
    $region23: #{basic_nn_forward.1} parent=1 // pred_check_branch
      %24 = sbr.rel (0) target = $region25
    $region24: #{basic_nn_forward.1} parent=1 // pred_region
      _
    $region25: #{basic_nn_forward.1} parent=1 // pred_fallthru
      _
    // Predicated region
    $region26: #{basic_nn_forward.1} parent=1 // pred_check
      _
    $region27: #{basic_nn_forward.1} parent=1 // pred_check_branch
      %26 = sbr.rel (0) target = $region29
    $region28: #{basic_nn_forward.1} parent=1 // pred_region
      _
    $region29: #{basic_nn_forward.1} parent=1 // pred_fallthru
      _
    %v27 = vld [vmem:[%s0] sm:$0xff]
    %v28 = vld [vmem:[%s1] sm:$0xff]
    %v29 = vld [vmem:[%s1 + $0x8] sm:$0xff]
    %v30 = vld [vmem:[%s1 + $0x10] sm:$0xff]
    %v31 = vld [vmem:[%s1 + $0x18] sm:$0xff]
    %v32 = vld [vmem:[%s1 + $0x20] sm:$0xff]
    %v33 = vld [vmem:[%s1 + $0x28] sm:$0xff]
    %v34 = vld [vmem:[%s1 + $0x30] sm:$0xff]
    %v35 = vld [vmem:[%s1 + $0x38] sm:$0xff]
    %v36 = vld [vmem:[%s1 + $0x40] sm:$0xff]
    %v37 = vld [vmem:[%s1 + $0x48] sm:$0xff]
    %v38 = vld [vmem:[%s1 + $0x50] sm:$0xff]
    %v39 = vld [vmem:[%s1 + $0x58] sm:$0xff]
    %v40 = vld [vmem:[%s1 + $0x60] sm:$0xff]
    %v41 = vld [vmem:[%s1 + $0x68] sm:$0xff]
    %v42 = vld [vmem:[%s1 + $0x70] sm:$0xff]
    %v43 = vld [vmem:[%s1 + $0x78] sm:$0xff]
    %v44 = vld [vmem:[%s2] sm:$0x1]
    %v46 = vlaneseq
    %v47 = vshrl.u32 %v46, 7
    %v48 = vsub.s32 0, %v47
    %v49 = vrot.slane %v44, %v48
    %51 = vmatprep.subr.mxu0 0.0
    %52 = vmatpush1.msra.mxu0 %v43
    %53 = vmatprep.subr.mxu0 0.0
    %54 = vmatpush1.msra.mxu0 %v42
    %55 = vmatprep.subr.mxu0 0.0
    %56 = vmatpush1.msra.mxu0 %v41
    %57 = vmatprep.subr.mxu0 0.0
    %58 = vmatpush1.msra.mxu0 %v40
    %59 = vmatprep.subr.mxu0 0.0
    %60 = vmatpush1.msra.mxu0 %v39
    %61 = vmatprep.subr.mxu0 0.0
    %62 = vmatpush1.msra.mxu0 %v38
    %63 = vmatprep.subr.mxu0 0.0
    %64 = vmatpush1.msra.mxu0 %v37
    %65 = vmatprep.subr.mxu0 0.0
    %66 = vmatpush1.msra.mxu0 %v36
    %67 = vmatprep.subr.mxu0 0.0
    %68 = vmatpush1.msra.mxu0 %v35
    %69 = vmatprep.subr.mxu0 0.0
    %70 = vmatpush1.msra.mxu0 %v34
    %71 = vmatprep.subr.mxu0 0.0
    %72 = vmatpush1.msra.mxu0 %v33
    %73 = vmatprep.subr.mxu0 0.0
    %74 = vmatpush1.msra.mxu0 %v32
    %75 = vmatprep.subr.mxu0 0.0
    %76 = vmatpush1.msra.mxu0 %v31
    %77 = vmatprep.subr.mxu0 0.0
    %78 = vmatpush1.msra.mxu0 %v30
    %79 = vmatprep.subr.mxu0 0.0
    %80 = vmatpush1.msra.mxu0 %v29
    %81 = vmatprep.subr.mxu0 0.0
    %82 = vmatpush1.msra.mxu0 %v28
    %83 = vmatprep.subr.mxu0 0.0
    %84 = vmatpush2.msra.mxu0 0.0
    %85 = vmatprep.subr.mxu0 0.0
    %86 = vmatpush2.msra.mxu0 0.0
    %87 = vmatprep.subr.mxu0 0.0
    %88 = vmatpush2.msra.mxu0 0.0
    %89 = vmatprep.subr.mxu0 0.0
    %90 = vmatpush2.msra.mxu0 0.0
    %91 = vmatprep.subr.mxu0 0.0
    %92 = vmatpush2.msra.mxu0 0.0
    %93 = vmatprep.subr.mxu0 0.0
    %94 = vmatpush2.msra.mxu0 0.0
    %95 = vmatprep.subr.mxu0 0.0
    %96 = vmatpush2.msra.mxu0 0.0
    %97 = vmatprep.subr.mxu0 0.0
    %98 = vmatpush2.msra.mxu0 0.0
    %99 = vmatprep.subr.mxu0 0.0
    %100 = vmatpush2.msra.mxu0 0.0
    %101 = vmatprep.subr.mxu0 0.0
    %102 = vmatpush2.msra.mxu0 0.0
    %103 = vmatprep.subr.mxu0 0.0
    %104 = vmatpush2.msra.mxu0 0.0
    %105 = vmatprep.subr.mxu0 0.0
    %106 = vmatpush2.msra.mxu0 0.0
    %107 = vmatprep.subr.mxu0 0.0
    %108 = vmatpush2.msra.mxu0 0.0
    %109 = vmatprep.subr.mxu0 0.0
    %110 = vmatpush2.msra.mxu0 0.0
    %111 = vmatprep.subr.mxu0 0.0
    %112 = vmatpush2.msra.mxu0 0.0
    %113 = vmatprep.subr.mxu0 0.0
    %114 = vmatpush2.msra.mxu0 0.0
    %115 = vmatprep.mubr.f32.mxu0 0.0
    %116 = vmatmul.mubr.f32.gmra.mxu0 %v27
    %v117 = vpop.f32.mrf.mxu0
    %v118 = vadd.f32 %v49, %v117
    %v119 = vpop.f32.mrf.mxu0
    %120 = vdwg.mxu0
    %v121 = vmax.f32 %v118, 0.0
    %v122 = vld [vmem:[%s3] sm:$0xff]
    %v123 = vld [vmem:[%s3 + $0x8] sm:$0xff]
    %v124 = vld [vmem:[%s3 + $0x10] sm:$0xff]
    %v125 = vld [vmem:[%s3 + $0x18] sm:$0xff]
    %v126 = vld [vmem:[%s3 + $0x20] sm:$0xff]
    %v127 = vld [vmem:[%s3 + $0x28] sm:$0xff]
    %v128 = vld [vmem:[%s3 + $0x30] sm:$0xff]
    %v129 = vld [vmem:[%s3 + $0x38] sm:$0xff]
    %v130 = vld [vmem:[%s3 + $0x40] sm:$0xff]
    %v131 = vld [vmem:[%s3 + $0x48] sm:$0xff]
    %v132 = vld [vmem:[%s3 + $0x50] sm:$0xff]
    %v133 = vld [vmem:[%s3 + $0x58] sm:$0xff]
    %v134 = vld [vmem:[%s3 + $0x60] sm:$0xff]
    %v135 = vld [vmem:[%s3 + $0x68] sm:$0xff]
    %v136 = vld [vmem:[%s3 + $0x70] sm:$0xff]
    %v137 = vld [vmem:[%s3 + $0x78] sm:$0xff]
    %v138 = vld [vmem:[%s4] sm:$0x1]
    %v140 = vlaneseq
    %v141 = vshrl.u32 %v140, 7
    %v142 = vsub.s32 0, %v141
    %v143 = vrot.slane %v138, %v142
    %145 = vmatprep.subr.mxu0 0.0
    %146 = vmatpush1.msra.mxu0 %v137
    %147 = vmatprep.subr.mxu0 0.0
    %148 = vmatpush1.msra.mxu0 %v136
    %149 = vmatprep.subr.mxu0 0.0
    %150 = vmatpush1.msra.mxu0 %v135
    %151 = vmatprep.subr.mxu0 0.0
    %152 = vmatpush1.msra.mxu0 %v134
    %153 = vmatprep.subr.mxu0 0.0
    %154 = vmatpush1.msra.mxu0 %v133
    %155 = vmatprep.subr.mxu0 0.0
    %156 = vmatpush1.msra.mxu0 %v132
    %157 = vmatprep.subr.mxu0 0.0
    %158 = vmatpush1.msra.mxu0 %v131
    %159 = vmatprep.subr.mxu0 0.0
    %160 = vmatpush1.msra.mxu0 %v130
    %161 = vmatprep.subr.mxu0 0.0
    %162 = vmatpush1.msra.mxu0 %v129
    %163 = vmatprep.subr.mxu0 0.0
    %164 = vmatpush1.msra.mxu0 %v128
    %165 = vmatprep.subr.mxu0 0.0
    %166 = vmatpush1.msra.mxu0 %v127
    %167 = vmatprep.subr.mxu0 0.0
    %168 = vmatpush1.msra.mxu0 %v126
    %169 = vmatprep.subr.mxu0 0.0
    %170 = vmatpush1.msra.mxu0 %v125
    %171 = vmatprep.subr.mxu0 0.0
    %172 = vmatpush1.msra.mxu0 %v124
    %173 = vmatprep.subr.mxu0 0.0
    %174 = vmatpush1.msra.mxu0 %v123
    %175 = vmatprep.subr.mxu0 0.0
    %176 = vmatpush1.msra.mxu0 %v122
    %177 = vmatprep.subr.mxu0 0.0
    %178 = vmatpush2.msra.mxu0 0.0
    %179 = vmatprep.subr.mxu0 0.0
    %180 = vmatpush2.msra.mxu0 0.0
    %181 = vmatprep.subr.mxu0 0.0
    %182 = vmatpush2.msra.mxu0 0.0
    %183 = vmatprep.subr.mxu0 0.0
    %184 = vmatpush2.msra.mxu0 0.0
    %185 = vmatprep.subr.mxu0 0.0
    %186 = vmatpush2.msra.mxu0 0.0
    %187 = vmatprep.subr.mxu0 0.0
    %188 = vmatpush2.msra.mxu0 0.0
    %189 = vmatprep.subr.mxu0 0.0
    %190 = vmatpush2.msra.mxu0 0.0
    %191 = vmatprep.subr.mxu0 0.0
    %192 = vmatpush2.msra.mxu0 0.0
    %193 = vmatprep.subr.mxu0 0.0
    %194 = vmatpush2.msra.mxu0 0.0
    %195 = vmatprep.subr.mxu0 0.0
    %196 = vmatpush2.msra.mxu0 0.0
    %197 = vmatprep.subr.mxu0 0.0
    %198 = vmatpush2.msra.mxu0 0.0
    %199 = vmatprep.subr.mxu0 0.0
    %200 = vmatpush2.msra.mxu0 0.0
    %201 = vmatprep.subr.mxu0 0.0
    %202 = vmatpush2.msra.mxu0 0.0
    %203 = vmatprep.subr.mxu0 0.0
    %204 = vmatpush2.msra.mxu0 0.0
    %205 = vmatprep.subr.mxu0 0.0
    %206 = vmatpush2.msra.mxu0 0.0
    %207 = vmatprep.subr.mxu0 0.0
    %208 = vmatpush2.msra.mxu0 0.0
    %209 = vmatprep.mubr.f32.mxu0 0.0
    %210 = vmatmul.mubr.f32.gmra.mxu0 %v121
    %v211 = vpop.f32.mrf.mxu0
    %v212 = vadd.f32 %v143, %v211
    %v213 = vpop.f32.mrf.mxu0
    %214 = vdwg.mxu0
    %v215 = vmax.f32 %v212, 0.0
    %v216 = vld [vmem:[%s5] sm:$0xff]
    %v217 = vld [vmem:[%s5 + $0x8] sm:$0xff]
    %v218 = vld [vmem:[%s5 + $0x10] sm:$0xff]
    %v219 = vld [vmem:[%s5 + $0x18] sm:$0xff]
    %v220 = vld [vmem:[%s5 + $0x20] sm:$0xff]
    %v221 = vld [vmem:[%s5 + $0x28] sm:$0xff]
    %v222 = vld [vmem:[%s5 + $0x30] sm:$0xff]
    %v223 = vld [vmem:[%s5 + $0x38] sm:$0xff]
    %v224 = vld [vmem:[%s5 + $0x40] sm:$0xff]
    %v225 = vld [vmem:[%s5 + $0x48] sm:$0xff]
    %v226 = vld [vmem:[%s5 + $0x50] sm:$0xff]
    %v227 = vld [vmem:[%s5 + $0x58] sm:$0xff]
    %v228 = vld [vmem:[%s5 + $0x60] sm:$0xff]
    %v229 = vld [vmem:[%s5 + $0x68] sm:$0xff]
    %v230 = vld [vmem:[%s5 + $0x70] sm:$0xff]
    %v231 = vld [vmem:[%s5 + $0x78] sm:$0xff]
    %v232 = vld [vmem:[%s6] sm:$0x1]
    %v234 = vlaneseq
    %v235 = vshrl.u32 %v234, 7
    %v236 = vsub.s32 0, %v235
    %v237 = vrot.slane %v232, %v236
    %239 = vmatprep.subr.mxu0 0.0
    %240 = vmatpush1.msra.mxu0 %v231
    %241 = vmatprep.subr.mxu0 0.0
    %242 = vmatpush1.msra.mxu0 %v230
    %243 = vmatprep.subr.mxu0 0.0
    %244 = vmatpush1.msra.mxu0 %v229
    %245 = vmatprep.subr.mxu0 0.0
    %246 = vmatpush1.msra.mxu0 %v228
    %247 = vmatprep.subr.mxu0 0.0
    %248 = vmatpush1.msra.mxu0 %v227
    %249 = vmatprep.subr.mxu0 0.0
    %250 = vmatpush1.msra.mxu0 %v226
    %251 = vmatprep.subr.mxu0 0.0
    %252 = vmatpush1.msra.mxu0 %v225
    %253 = vmatprep.subr.mxu0 0.0
    %254 = vmatpush1.msra.mxu0 %v224
    %255 = vmatprep.subr.mxu0 0.0
    %256 = vmatpush1.msra.mxu0 %v223
    %257 = vmatprep.subr.mxu0 0.0
    %258 = vmatpush1.msra.mxu0 %v222
    %259 = vmatprep.subr.mxu0 0.0
    %260 = vmatpush1.msra.mxu0 %v221
    %261 = vmatprep.subr.mxu0 0.0
    %262 = vmatpush1.msra.mxu0 %v220
    %263 = vmatprep.subr.mxu0 0.0
    %264 = vmatpush1.msra.mxu0 %v219
    %265 = vmatprep.subr.mxu0 0.0
    %266 = vmatpush1.msra.mxu0 %v218
    %267 = vmatprep.subr.mxu0 0.0
    %268 = vmatpush1.msra.mxu0 %v217
    %269 = vmatprep.subr.mxu0 0.0
    %270 = vmatpush1.msra.mxu0 %v216
    %271 = vmatprep.subr.mxu0 0.0
    %272 = vmatpush2.msra.mxu0 0.0
    %273 = vmatprep.subr.mxu0 0.0
    %274 = vmatpush2.msra.mxu0 0.0
    %275 = vmatprep.subr.mxu0 0.0
    %276 = vmatpush2.msra.mxu0 0.0
    %277 = vmatprep.subr.mxu0 0.0
    %278 = vmatpush2.msra.mxu0 0.0
    %279 = vmatprep.subr.mxu0 0.0
    %280 = vmatpush2.msra.mxu0 0.0
    %281 = vmatprep.subr.mxu0 0.0
    %282 = vmatpush2.msra.mxu0 0.0
    %283 = vmatprep.subr.mxu0 0.0
    %284 = vmatpush2.msra.mxu0 0.0
    %285 = vmatprep.subr.mxu0 0.0
    %286 = vmatpush2.msra.mxu0 0.0
    %287 = vmatprep.subr.mxu0 0.0
    %288 = vmatpush2.msra.mxu0 0.0
    %289 = vmatprep.subr.mxu0 0.0
    %290 = vmatpush2.msra.mxu0 0.0
    %291 = vmatprep.subr.mxu0 0.0
    %292 = vmatpush2.msra.mxu0 0.0
    %293 = vmatprep.subr.mxu0 0.0
    %294 = vmatpush2.msra.mxu0 0.0
    %295 = vmatprep.subr.mxu0 0.0
    %296 = vmatpush2.msra.mxu0 0.0
    %297 = vmatprep.subr.mxu0 0.0
    %298 = vmatpush2.msra.mxu0 0.0
    %299 = vmatprep.subr.mxu0 0.0
    %300 = vmatpush2.msra.mxu0 0.0
    %301 = vmatprep.subr.mxu0 0.0
    %302 = vmatpush2.msra.mxu0 0.0
    %303 = vmatprep.mubr.f32.mxu0 0.0
    %304 = vmatmul.mubr.f32.gmra.mxu0 %v215
    %v305 = vpop.f32.mrf.mxu0
    %v306 = vadd.f32 %v237, %v305
    %v307 = vpop.f32.mrf.mxu0
    %308 = vdwg.mxu0
    %309 = vst [vmem:[#allocation2] sm:$0xff] %v306
    // Predicated region
    $region30: #{basic_nn_forward.1} parent=1 // pred_check
      _
    $region31: #{basic_nn_forward.1} parent=1 // pred_check_branch
      %311 = sbr.rel (0) target = $region33
    $region32: #{basic_nn_forward.1} parent=1 // pred_region
      %s313 = ssub.s32 128, 128
      %314 = vsyncadd [#allocation3], %s313
      %s316 = sshll.u32 [#allocation2], 4
      %s317 = int_to_ptr.vmem [resolvable:$true] %s316
      %319 = dma.vmem_to_hbm [thread:$0]  %s317, 128, %s7, [#allocation3]
    $region33: #{basic_nn_forward.1} parent=1 // pred_fallthru
      _
    // Predicated region
    $region34: #{basic_nn_forward.1} parent=1 // pred_check
      _
    $region35: #{basic_nn_forward.1} parent=1 // pred_check_branch
      %321 = sbr.rel (0) target = $region37
    $region36: #{basic_nn_forward.1} parent=1 // pred_region
      %322 = dma.done [#allocation3], 128
    $region37: #{basic_nn_forward.1} parent=1 // pred_fallthru
      _
    %323 = vsyncpa [#allocation3], 1

</llo_original>
